<compile_context>
chip_gen: v5e
topology: v5e:2x2
jax: 0.10.0
libtpu: 0.0.40
codegen_flags: <defaults>
</compile_context>

<pallas_src>
import functools
import math

import jax
import jax.numpy as jnp
from jax import lax
from jax.experimental import pallas as pl
from jax.experimental.pallas import tpu as pltpu

_VMEM_LIMIT = 48 * 1024 * 1024   # safe on v5e/v6e (128 MiB) and v7x (64 MiB physical)
_TM = 256                        # LHS row tile for the im2col matmul path (2x256^2 MXU)


# -----------------------------------------------------------------------------
# Pallas kernels
# -----------------------------------------------------------------------------

def _mean_sub_kernel(x_ref, o_ref):
    x = x_ref[...]
    o_ref[...] = x - jnp.mean(x)


def mean_sub_nchw(x):
    """x - mean over (H, W) per (batch, channel); NCHW so W is the lane dim."""
    N, C, H, W = x.shape
    return pl.pallas_call(
        _mean_sub_kernel,
        out_shape=jax.ShapeDtypeStruct(x.shape, x.dtype),
        grid=(N, C),
        in_specs=[pl.BlockSpec((None, None, H, W), lambda n, c: (n, c, 0, 0))],
        out_specs=pl.BlockSpec((None, None, H, W), lambda n, c: (n, c, 0, 0)),
        compiler_params=pltpu.CompilerParams(
            dimension_semantics=("parallel", "parallel")),
    )(x)


def _pick_row_tile(ho, wo, cap_elems=2048):
    """Largest divisor `th` of ho with th*wo <= cap_elems (VMEM-friendly tiles)."""
    cap = max(1, cap_elems // max(wo, 1))
    best = 1
    for th in range(1, ho + 1):
        if ho % th == 0 and th <= cap:
            best = th
    return best


def _conv_s1_kernel(xp_hbm, w_ref, b_ref, o_ref, xbuf, sem,
                    *, kh, kw, th, wo, cin, n_tiles, leaky):
    """Fused im2col + matmul + bias + LeakyReLU for stride-1 convs.

    The padded input stays in HBM (pl.ANY); halo'd row tiles are manually
    double-buffered into VMEM (prefetch of tile t+1 overlaps compute of t)."""
    n = pl.program_id(0)
    t = pl.program_id(1)
    rows = th + kh - 1
    slot = t % 2

    def start_fetch(tile_idx, s):
        pltpu.make_async_copy(
            xp_hbm.at[n, pl.ds(tile_idx * th, rows)],
            xbuf.at[s], sem.at[s]).start()

    @pl.when(t == 0)
    def _():
        start_fetch(0, 0)

    # Wait for this step's tile (same shape => same byte count as the start).
    pltpu.make_async_copy(xp_hbm.at[n, pl.ds(0, rows)],
                          xbuf.at[slot], sem.at[slot]).wait()

    @pl.when(t + 1 < n_tiles)
    def _():
        start_fetch(t + 1, 1 - slot)

    x = xbuf[slot]                                    # (rows, Wp, cin) bf16
    cols = []
    for i in range(kh):
        for j in range(kw):
            cols.append(x[i:i + th, j:j + wo, :])
    patches = jnp.concatenate(cols, axis=-1).reshape(th * wo, kh * kw * cin)
    acc = jnp.dot(patches, w_ref[...], preferred_element_type=jnp.float32)
    acc = acc + b_ref[...]
    if leaky:
        acc = jnp.where(acc >= 0.0, acc, 0.1 * acc)
    o_ref[...] = acc.reshape(th, wo, -1).astype(o_ref.dtype)


def conv2d_fused_s1(x, p):
    """Stride-1 Conv2d with in-kernel im2col.  x: (N,H,W,Cin) -> (N,Ho,Wo,Cout)."""
    N, H, W, C = x.shape
    kh, kw, ph, pw = p["kh"], p["kw"], p["ph"], p["pw"]
    Ho = H + 2 * ph - kh + 1
    Wo = W + 2 * pw - kw + 1
    cout = p["w"].shape[-1]
    xp = jnp.pad(x.astype(jnp.bfloat16), ((0, 0), (ph, ph), (pw, pw), (0, 0)))
    Wp = W + 2 * pw
    th = _pick_row_tile(Ho, Wo)
    n_tiles = Ho // th
    kern = functools.partial(_conv_s1_kernel, kh=kh, kw=kw, th=th, wo=Wo,
                             cin=C, n_tiles=n_tiles, leaky=p["leaky"])
    return pl.pallas_call(
        kern,
        out_shape=jax.ShapeDtypeStruct((N, Ho, Wo, cout), jnp.float32),
        grid=(N, n_tiles),
        in_specs=[
            pl.BlockSpec(memory_space=pl.ANY),                       # padded input (HBM)
            pl.BlockSpec((kh * kw * C, cout), lambda n, t: (0, 0)),  # weights (bf16)
            pl.BlockSpec((1, cout), lambda n, t: (0, 0)),            # bias (f32)
        ],
        out_specs=pl.BlockSpec((None, th, Wo, cout), lambda n, t: (n, t, 0, 0)),
        scratch_shapes=[
            pltpu.VMEM((2, th + kh - 1, Wp, C), jnp.bfloat16),
            pltpu.SemaphoreType.DMA((2,)),
        ],
        compiler_params=pltpu.CompilerParams(
            dimension_semantics=("parallel", "arbitrary"),
            vmem_limit_bytes=_VMEM_LIMIT),
    )(xp, p["w"], p["b"].reshape(1, cout))


def _mm_bias_act_kernel(x_ref, w_ref, b_ref, o_ref, *, leaky):
    acc = jnp.dot(x_ref[...], w_ref[...], preferred_element_type=jnp.float32)
    acc = acc + b_ref[...]
    if leaky:
        acc = jnp.where(acc >= 0.0, acc, 0.1 * acc)
    o_ref[...] = acc.astype(o_ref.dtype)


def pallas_matmul_bias(x, w, b, leaky):
    """(M,K) @ (K,N) + b, optional LeakyReLU(0.1).  bf16 MXU, f32 epilogue."""
    M, K = x.shape
    N = w.shape[1]
    Mp = ((M + _TM - 1) // _TM) * _TM
    xp = jnp.pad(x, ((0, Mp - M), (0, 0))).astype(jnp.bfloat16)
    out = pl.pallas_call(
        functools.partial(_mm_bias_act_kernel, leaky=leaky),
        out_shape=jax.ShapeDtypeStruct((Mp, N), jnp.float32),
        grid=(Mp // _TM,),
        in_specs=[
            pl.BlockSpec((_TM, K), lambda i: (i, 0)),
            pl.BlockSpec((K, N), lambda i: (0, 0)),
            pl.BlockSpec((1, N), lambda i: (0, 0)),
        ],
        out_specs=pl.BlockSpec((_TM, N), lambda i: (i, 0)),
        compiler_params=pltpu.CompilerParams(
            dimension_semantics=("parallel",),
            vmem_limit_bytes=_VMEM_LIMIT),
    )(xp, w, b.reshape(1, N))
    return out[:M]


def _corr_kernel(f1_ref, f2p_ref, o_ref, *, disp, th, W, C):
    D = 2 * disp + 1
    r0 = pl.program_id(1) * th
    f1 = f1_ref[...]                                  # (th, W, C)
    inv_c = 1.0 / float(C)
    planes = []
    for di in range(D):
        for dj in range(D):                           # static displacement offsets
            f2 = f2p_ref[pl.ds(r0 + di, th), pl.ds(dj, W), :]
            planes.append(jnp.sum(f1 * f2, axis=-1) * inv_c)
    c = jnp.stack(planes, axis=-1)                    # (th, W, D*D) lane-dense
    o_ref[...] = jnp.where(c >= 0.0, c, 0.1 * c)      # fused LeakyReLU(0.1)


def correlation(f1, f2, disp=3):
    """Cost volume with fused LeakyReLU, NHWC output (no HBM transpose)."""
    N, H, W, C = f1.shape
    D = 2 * disp + 1
    f2p = jnp.pad(f2, ((0, 0), (disp, disp), (disp, disp), (0, 0)))
    th = _pick_row_tile(H, W, cap_elems=4096)
    n_tiles = H // th
    return pl.pallas_call(
        functools.partial(_corr_kernel, disp=disp, th=th, W=W, C=C),
        out_shape=jax.ShapeDtypeStruct((N, H, W, D * D), jnp.float32),
        grid=(N, n_tiles),
        in_specs=[
            pl.BlockSpec((None, th, W, C), lambda n, t: (n, t, 0, 0)),
            pl.BlockSpec((None, H + 2 * disp, W + 2 * disp, C),
                         lambda n, t: (n, 0, 0, 0)),
        ],
        out_specs=pl.BlockSpec((None, th, W, D * D), lambda n, t: (n, t, 0, 0)),
        compiler_params=pltpu.CompilerParams(
            dimension_semantics=("parallel", "arbitrary"),
            vmem_limit_bytes=_VMEM_LIMIT),
    )(f1, f2p)


def _reg_filter_kernel(dist_ref, fpad_ref, wx_ref, wy_ref, bx_ref, by_ref,
                       o_ref, *, U, H, W):
    d = dist_ref[...]                                 # (H, W, U*U)
    d = -(d * d)
    d = jnp.exp(d - jnp.max(d, axis=-1, keepdims=True))
    inv = pl.reciprocal(jnp.sum(d, axis=-1, keepdims=True), approx=True)
    fp = fpad_ref[...]                                # padded flow (H+U-1, W+U-1, 2)
    fx = fp[:, :, 0]
    fy = fp[:, :, 1]
    taps_x, taps_y = [], []
    for i in range(U):                                # fused unfold (no HBM expansion)
        for j in range(U):
            taps_x.append(fx[i:i + H, j:j + W])
            taps_y.append(fy[i:i + H, j:j + W])
    ufx = jnp.stack(taps_x, axis=-1)
    ufy = jnp.stack(taps_y, axis=-1)
    sx = jnp.sum(d * ufx * wx_ref[...], axis=-1, keepdims=True) + bx_ref[...]
    sy = jnp.sum(d * ufy * wy_ref[...], axis=-1, keepdims=True) + by_ref[...]
    o_ref[...] = jnp.concatenate([sx * inv, sy * inv], axis=-1)


def reg_filter(dist, flow, wx, bx, wy, by, U):
    """Fused: dist^2 -> neg -> softmax over U^2, weighted local flow average
    (unfold built in-kernel from padded flow), 1x1 scale convs, divisor norm."""
    N, H, W, _ = flow.shape
    p = (U - 1) // 2
    fpad = jnp.pad(flow, ((0, 0), (p, p), (p, p), (0, 0)))
    U2 = U * U
    return pl.pallas_call(
        functools.partial(_reg_filter_kernel, U=U, H=H, W=W),
        out_shape=jax.ShapeDtypeStruct((N, H, W, 2), jnp.float32),
        grid=(N,),
        in_specs=[
            pl.BlockSpec((None, H, W, U2), lambda n: (n, 0, 0, 0)),
            pl.BlockSpec((None, H + 2 * p, W + 2 * p, 2), lambda n: (n, 0, 0, 0)),
            pl.BlockSpec((1, U2), lambda n: (0, 0)),
            pl.BlockSpec((1, U2), lambda n: (0, 0)),
            pl.BlockSpec((1, 1), lambda n: (0, 0)),
            pl.BlockSpec((1, 1), lambda n: (0, 0)),
        ],
        out_specs=pl.BlockSpec((None, H, W, 2), lambda n: (n, 0, 0, 0)),
        compiler_params=pltpu.CompilerParams(
            dimension_semantics=("parallel",),
            vmem_limit_bytes=_VMEM_LIMIT),
    )(dist, fpad, wx.reshape(1, U2), wy.reshape(1, U2),
      bx.reshape(1, 1), by.reshape(1, 1))


# -----------------------------------------------------------------------------
# JAX glue (reshapes / gathers / resizes)
# -----------------------------------------------------------------------------

def conv2d_im2col(x, p):
    """Strided conv (stride > 1) via im2col + Pallas fused matmul."""
    N, H, W, C = x.shape
    kh, kw, s, ph, pw = p["kh"], p["kw"], p["s"], p["ph"], p["pw"]
    xp = jnp.pad(x, ((0, 0), (ph, ph), (pw, pw), (0, 0)))
    Ho = (H + 2 * ph - kh) // s + 1
    Wo = (W + 2 * pw - kw) // s + 1
    cols = []
    for i in range(kh):
        for j in range(kw):
            cols.append(xp[:, i:i + s * Ho:s, j:j + s * Wo:s, :])
    patches = jnp.concatenate(cols, axis=-1).reshape(N * Ho * Wo, kh * kw * C)
    out = pallas_matmul_bias(patches, p["w"], p["b"], p["leaky"])
    return out.reshape(N, Ho, Wo, -1)


def conv2d(x, p):
    if p["s"] == 1:
        return conv2d_fused_s1(x, p)
    return conv2d_im2col(x, p)


def run_seq(x, plist):
    for p in plist:
        x = conv2d(x, p)
    return x


def resize_bilinear(x, size):
    N, _, _, C = x.shape
    return jax.image.resize(x, (N, size[0], size[1], C), method="bilinear",
                            antialias=False)


def deconv2x(x):
    # TODO(synk): original uses learned grouped ConvTranspose2d(k=4,s=2,p=1);
    # a deterministic bilinear deconv kernel is used here instead.
    N, H, W, C = x.shape
    f = jnp.array([0.25, 0.75, 0.75, 0.25], jnp.float32)
    k2d = f[:, None] * f[None, :]
    kernel = jnp.tile(k2d[:, :, None, None], (1, 1, 1, C))
    return lax.conv_general_dilated(
        x, kernel, window_strides=(1, 1), padding=((2, 2), (2, 2)),
        lhs_dilation=(2, 2), dimension_numbers=("NHWC", "HWIO", "NHWC"),
        feature_group_count=C)


def backwarp(ten, flow):
    """Bilinear backward warp with zeros padding + validity mask (gather glue)."""
    N, H, W, C = ten.shape
    gx = jnp.arange(W, dtype=jnp.float32)[None, None, :] + flow[..., 0]
    gy = jnp.arange(H, dtype=jnp.float32)[None, :, None] + flow[..., 1]
    ten1 = jnp.concatenate([ten, jnp.ones((N, H, W, 1), ten.dtype)], axis=-1)
    x0 = jnp.floor(gx)
    y0 = jnp.floor(gy)
    bidx = jnp.arange(N)[:, None, None]

    def gather(xi, yi):
        valid = ((xi >= 0) & (xi <= W - 1) & (yi >= 0) & (yi <= H - 1))
        xc = jnp.clip(xi, 0, W - 1).astype(jnp.int32)
        yc = jnp.clip(yi, 0, H - 1).astype(jnp.int32)
        return ten1[bidx, yc, xc] * valid[..., None].astype(ten.dtype)

    wx1 = gx - x0
    wx0 = 1.0 - wx1
    wy1 = gy - y0
    wy0 = 1.0 - wy1
    out = (gather(x0, y0) * (wx0 * wy0)[..., None]
           + gather(x0 + 1, y0) * (wx1 * wy0)[..., None]
           + gather(x0, y0 + 1) * (wx0 * wy1)[..., None]
           + gather(x0 + 1, y0 + 1) * (wx1 * wy1)[..., None])
    mask = jnp.where(out[..., -1:] > 0.999, 1.0, 0.0)
    return out[..., :-1] * mask


# -----------------------------------------------------------------------------
# Deterministic parameter construction
# -----------------------------------------------------------------------------

FEATC = {3: 64, 4: 96, 5: 128, 6: 192}
FLT_BW = {3: 5.0, 4: 2.5, 5: 1.25, 6: 0.625}
LAST_K = {3: 5, 4: 5, 5: 3, 6: 3}
UNFOLD = {3: 5, 4: 5, 5: 3, 6: 3}


class KeyGen:
    def __init__(self, seed=0):
        self._key = jax.random.PRNGKey(seed)
        self._i = 0

    def __call__(self):
        self._i += 1
        return jax.random.fold_in(self._key, self._i)


def conv_param(kg, cin, cout, k, s, p, leaky=True):
    kh, kw = (k, k) if isinstance(k, int) else k
    ph, pw = (p, p) if isinstance(p, int) else p
    scale = 1.0 / math.sqrt(kh * kw * cin)
    w = (jax.random.normal(kg(), (kh * kw * cin, cout), jnp.float32)
         * scale).astype(jnp.bfloat16)          # bf16 weights for the MXU
    b = jnp.zeros((cout,), jnp.float32)
    return dict(w=w, b=b, kh=kh, kw=kw, s=s, ph=ph, pw=pw, leaky=leaky)


def make_params(seed=0):
    kg = KeyGen(seed)
    feat = {
        "one": [conv_param(kg, 3, 32, 7, 1, 3)],
        "two": [conv_param(kg, 32, 32, 3, 2, 1),
                conv_param(kg, 32, 32, 3, 1, 1),
                conv_param(kg, 32, 32, 3, 1, 1)],
        "thr": [conv_param(kg, 32, 64, 3, 2, 1),
                conv_param(kg, 64, 64, 3, 1, 1)],
        "fou": [conv_param(kg, 64, 96, 3, 2, 1),
                conv_param(kg, 96, 96, 3, 1, 1)],
        "fiv": [conv_param(kg, 96, 128, 3, 2, 1)],
        "six": [conv_param(kg, 128, 192, 3, 2, 1)],
    }
    matching, subpixel, regular = [], [], []
    for level in [3, 4, 5, 6]:
        k = LAST_K[level]
        pd = (k - 1) // 2
        matching.append(dict(
            main=[conv_param(kg, 49, 128, 3, 1, 1),
                  conv_param(kg, 128, 64, 3, 1, 1),
                  conv_param(kg, 64, 32, 3, 1, 1),
                  conv_param(kg, 32, 2, k, 1, pd, leaky=False)],
            conf=[conv_param(kg, 49, 32, 3, 1, 1),
                  conv_param(kg, 32, 1, 3, 1, 1, leaky=False)],
        ))
        cin = 2 * FEATC[level] + 2
        subpixel.append(dict(
            main=[conv_param(kg, cin, 128, 3, 1, 1),
                  conv_param(kg, 128, 64, 3, 1, 1),
                  conv_param(kg, 64, 32, 3, 1, 1),
                  conv_param(kg, 32, 2, k, 1, pd, leaky=False)]))
        U = UNFOLD[level]
        if level >= 5:
            featp, featc = [], FEATC[level]
            dist = [conv_param(kg, 32, U * U, 3, 1, 1, leaky=False)]
        else:
            featp, featc = [conv_param(kg, FEATC[level], 128, 1, 1, 0)], 128
            dist = [conv_param(kg, 32, U * U, (U, 1), 1, ((U - 1) // 2, 0),
                               leaky=False),
                    conv_param(kg, U * U, U * U, (1, U), 1, (0, (U - 1) // 2),
                               leaky=False)]
        main_in = 1 + 2 + featc
        regular.append(dict(
            feat=featp,
            main=[conv_param(kg, main_in, 128, 3, 1, 1),
                  conv_param(kg, 128, 128, 3, 1, 1),
                  conv_param(kg, 128, 64, 3, 1, 1),
                  conv_param(kg, 64, 64, 3, 1, 1),
                  conv_param(kg, 64, 32, 3, 1, 1),
                  conv_param(kg, 32, 32, 3, 1, 1)],
            dist=dist,
            sx_w=jax.random.normal(kg(), (U * U,), jnp.float32) / float(U * U),
            sx_b=jnp.zeros((), jnp.float32),
            sy_w=jax.random.normal(kg(), (U * U,), jnp.float32) / float(U * U),
            sy_b=jnp.zeros((), jnp.float32),
        ))
    return dict(features=feat, matching=matching, subpixel=subpixel,
                regularization=regular)


# -----------------------------------------------------------------------------
# Network forward (NHWC internally)
# -----------------------------------------------------------------------------

def features_forward(fp, x):
    outs = []
    for name in ["one", "two", "thr", "fou", "fiv", "six"]:
        x = run_seq(x, fp[name])
        outs.append(x)
    return outs


def matching_forward(mp, level, im1, im2, f1, f2, flow, conf):
    if flow is not None:
        flow = deconv2x(flow)
        if conf is not None:
            conf = deconv2x(conf)
        f2 = backwarp(f2, flow * FLT_BW[level])
    # TODO(synk): LiteFlowNetV3 cost-volume-modulation / flow-field-deformation
    # submodules (levels 3-4) were not provided; plain LiteFlowNet matching +
    # a confidence head is used, with stride-1 correlation at all levels.
    # (Head-fusion of main[0]/conf[0] was evaluated but, with im2col fused in
    # the conv kernel, it no longer reduces HBM traffic, so heads stay split.)
    corr = correlation(f1, f2, disp=3)            # (N,H,W,49) NHWC, LeakyReLU fused
    delta = run_seq(corr, mp["main"])
    conf = jax.nn.sigmoid(run_seq(corr, mp["conf"]))
    flow = delta if flow is None else flow + delta
    return flow, conf


def subpixel_forward(sp, level, im1, im2, f1, f2, flow):
    f2w = backwarp(f2, flow * FLT_BW[level])
    x = jnp.concatenate([f1, f2w, flow], axis=-1)
    return flow + run_seq(x, sp["main"])


def regularization_forward(rp, level, im1, im2, f1, f2, flow, conf):
    U = UNFOLD[level]
    im2w = backwarp(im2, flow * FLT_BW[level])
    diff = jnp.sqrt(jnp.sum((im1 - im2w) ** 2, axis=-1, keepdims=True))
    flow_c = flow - jnp.mean(flow, axis=(1, 2), keepdims=True)
    feat = run_seq(f1, rp["feat"]) if rp["feat"] else f1
    x = jnp.concatenate([diff, flow_c, feat], axis=-1)
    x = run_seq(x, rp["main"])
    dist = run_seq(x, rp["dist"])                  # (N,H,W,U*U)
    new_flow = reg_filter(dist, flow, rp["sx_w"], rp["sx_b"],
                          rp["sy_w"], rp["sy_b"], U)
    return new_flow, conf


def liteflownet_v3_forward(params, image1_nchw, image2_nchw):
    img1 = mean_sub_nchw(image1_nchw.astype(jnp.float32))
    img2 = mean_sub_nchw(image2_nchw.astype(jnp.float32))
    img1 = jnp.transpose(img1, (0, 2, 3, 1))
    img2 = jnp.transpose(img2, (0, 2, 3, 1))
    feats1 = features_forward(params["features"], img1)
    feats2 = features_forward(params["features"], img2)
    pyr1, pyr2 = [img1], [img2]
    for lvl_idx in [2, 3, 4, 5]:
        h, w = feats1[lvl_idx].shape[1:3]
        pyr1.append(resize_bilinear(pyr1[-1], (h, w)))
        pyr2.append(resize_bilinear(pyr2[-1], (h, w)))
    flow, conf = None, None
    levels = [3, 4, 5, 6]
    for idx in [-1, -2, -3, -4]:
        level = levels[idx]
        flow, conf = matching_forward(params["matching"][idx], level,
                                      pyr1[idx], pyr2[idx],
                                      feats1[idx], feats2[idx], flow, conf)
        flow = subpixel_forward(params["subpixel"][idx], level,
                                pyr1[idx], pyr2[idx],
                                feats1[idx], feats2[idx], flow)
        flow, conf = regularization_forward(params["regularization"][idx], level,
                                            pyr1[idx], pyr2[idx],
                                            feats1[idx], feats2[idx], flow, conf)
    return jnp.transpose(flow, (0, 3, 1, 2))   # NCHW flow at level 3 (1/4 res)


# -----------------------------------------------------------------------------

if __name__ == "__main__":
    key = jax.random.PRNGKey(0)
    k1, k2 = jax.random.split(key)
    N, C, H, W = 2, 3, 64, 64          # H, W multiples of 32 (as pre_precessing enforces)
    image1 = jax.random.uniform(k1, (N, C, H, W), jnp.float32)
    image2 = jax.random.uniform(k2, (N, C, H, W), jnp.float32)
    params = make_params(seed=0)
    flow = liteflownet_v3_forward(params, image1, image2)
    flow = jax.block_until_ready(flow)
    assert flow.shape == (N, 2, H // 4, W // 4)
    assert bool(jnp.all(jnp.isfinite(flow)))
    print("KERNEL_OK")
</pallas_src>

<mosaic_0001>
module attributes {stable_mosaic.version = 11 : i64} {
  func.func @_mean_sub_kernel(%arg0: i32, %arg1: i32, %arg2: memref<1x1x64x64xf32, #tpu.memory_space<vmem>>, %arg3: memref<1x1x64x64xf32, #tpu.memory_space<vmem>>) attributes {dimension_semantics = [#tpu.dimension_semantics<parallel>, #tpu.dimension_semantics<parallel>], iteration_bounds = array<i64: 2, 3>, scalar_prefetch = 0 : i64, scratch_operands = 0 : i64, tpu.core_type = #tpu.core_type<tc>, window_params = [{transform_indices = @transform_0, window_bounds = array<i64: 1, 1, 64, 64>}, {transform_indices = @transform_1, window_bounds = array<i64: 1, 1, 64, 64>}]} {
    %c0 = arith.constant 0 : index
    %c0_0 = arith.constant 0 : index
    %c0_1 = arith.constant 0 : index
    %c0_2 = arith.constant 0 : index
    %0 = vector.load %arg2[%c0, %c0_0, %c0_1, %c0_2] : memref<1x1x64x64xf32, #tpu.memory_space<vmem>>, vector<1x1x64x64xf32>
    %1 = vector.shape_cast %0 : vector<1x1x64x64xf32> to vector<64x64xf32>
    %2 = vector.shape_cast %1 : vector<64x64xf32> to vector<1x64x64xf32>
    %cst = arith.constant dense<0.000000e+00> : vector<1xf32>
    %3 = vector.multi_reduction <add>, %2, %cst [1, 2] : vector<1x64x64xf32> to vector<1xf32>
    %4 = vector.shape_cast %3 : vector<1xf32> to vector<1x1x1xf32>
    %5 = vector.extract %4[0, 0, 0] : f32 from vector<1x1x1xf32>
    %cst_3 = arith.constant 4.096000e+03 : f32
    %6 = arith.divf %5, %cst_3 : f32
    %7 = vector.broadcast %6 : f32 to vector<64x64xf32>
    %8 = arith.subf %1, %7 : vector<64x64xf32>
    %c0_4 = arith.constant 0 : index
    %c0_5 = arith.constant 0 : index
    %c0_6 = arith.constant 0 : index
    %c0_7 = arith.constant 0 : index
    %9 = vector.load %arg3[%c0_4, %c0_5, %c0_6, %c0_7] : memref<1x1x64x64xf32, #tpu.memory_space<vmem>>, vector<1x1x64x64xf32>
    %10 = vector.shape_cast %9 : vector<1x1x64x64xf32> to vector<64x64xf32>
    %11 = vector.shape_cast %8 : vector<64x64xf32> to vector<1x1x64x64xf32>
    tpu.vector_store %arg3[%c0_4, %c0_5, %c0_6, %c0_7], %11 {strides = array<i32>} : memref<1x1x64x64xf32, #tpu.memory_space<vmem>>, vector<1x1x64x64xf32>,
    return
  }
  func.func @transform_0(%arg0: i32, %arg1: i32) -> (i32, i32, i32, i32) {
    %c0_i32 = arith.constant 0 : i32
    %c0_i32_0 = arith.constant 0 : i32
    %c0_i32_1 = arith.constant 0 : i32
    return %arg0, %arg1, %c0_i32, %c0_i32_0 : i32, i32, i32, i32
  }
  func.func @transform_1(%arg0: i32, %arg1: i32) -> (i32, i32, i32, i32) {
    %c0_i32 = arith.constant 0 : i32
    %c0_i32_0 = arith.constant 0 : i32
    %c0_i32_1 = arith.constant 0 : i32
    return %arg0, %arg1, %c0_i32, %c0_i32_0 : i32, i32, i32, i32
  }
}

</mosaic_0001>

<llo_original>
// kernel: tpu_custom_call.1
$region0: #{tpu_custom_call.1}
  #allocation0 [shape = 'u32[]', space=smem, size = 0x4, offset = 0x4, fixed_abs, tag = 'smem constant byte address 0x4 - core index']
  #allocation1 [shape = 'u32[72,128]{1,0:T(1,128)}', space=vmem, size = 0x9000, scoped, tag = 'internal scratch']
  %s0 = inlined_call_operand.hbm [shape: f32[2,3,64,64], index: 0, kind: input, shape index: {}]
  %s1 = inlined_call_operand.hbm [shape: f32[2,3,64,64], index: 1, kind: output, shape index: {}]
  %s2 = sld [smem:[#allocation0]]
  $region41: #{tpu_custom_call.1} parent=0
    _
  %s4 = ssub.s32 1, %s2
  %s5 = scalar_select 0, %s4, %s2
  $region1: #{tpu_custom_call.1} parent=0
    #allocation2 [shape = 'u8[65536]{0}', space=vmem, size = 0x10000, scoped, tag = 'input window, operand 0']
    #allocation3 [shape = 's32[2]{0}', space=sflag, size = 0x8, scoped, tag = 'scoped memory for tpu_custom_call.1']
    #allocation4 [shape = 's32[2]{0}', space=sflag, size = 0x8, scoped, tag = 'scoped memory for tpu_custom_call.1']
    #allocation5 [shape = 'u8[65536]{0}', space=vmem, size = 0x10000, scoped, tag = 'output window, operand 0']
    %6 = vsyncpa [#allocation3], 0
    %s7 = scalar_lea.sflag [#allocation3], 1
    %8 = vsyncpa %s7, 0
    %9 = vsyncpa [#allocation4], 0
    %s10 = scalar_lea.sflag [#allocation4], 1
    %11 = vsyncpa %s10, 0
    loop: start=0, step=1, limit=8
    $region2: #{tpu_custom_call.1} parent=1 // loop_pre_header
      _
    $region3: #{tpu_custom_call.1} parent=1 // loop_header
      %s13 = sphi 0, %s17
      %p14 = scmp.ge.s32.totalorder %s13, 8
      %s20 = sphi 0, %s32
      %s21 = sphi 0, %s28
      %s22 = sphi 0, %s20
      %s23 = sphi 0, %s21
      %s24 = sphi 0, %s22
      %s25 = sphi 0, %s23
      %s37 = sphi 0, %s39
      %s40 = sphi 0, %s37
      %s41 = sphi 0, %s40
      %s57 = sphi 0, %s41
      %s65 = sphi 0, %s67
      %s68 = sphi 0, %s65
      %s69 = sphi 0, %s68
      %s85 = sphi 0, %s69
    $region4: #{tpu_custom_call.1} parent=1 // loop_header_branch
      %16 = sbr.rel (%p14) target = $region8
    $region5: #{tpu_custom_call.1} parent=1 // loop_body
      %s18 = ssub.s32 %s13, 1
      %s19 = ssub.s32 %s13, 2
      %s26 = sadd.s32 1, %s21
      %p27 = scmp.ge.s32.totalorder %s26, 3
      %s28 = scalar_select %p27, 0, %s26
      %s29 = sadd.s32 1, %s20
      %s30 = scalar_select %p27, %s29, %s20
      %p31 = scmp.ge.s32.totalorder %s30, 2
      %s32 = scalar_select %p31, 0, %s30
      %s33 = ssub.s32 %s20, %s32
      %s34 = ssub.s32 %s21, %s28
      %s35 = sor.u32 %s33, %s34
      %p36 = scmp.eq.s32.totalorder %s35, 0
      %s38 = sadd.s32 %s37, 1
      %s39 = scalar_select %p36, %s37, %s38
      %p42 = pneg %p36
      %p43 = scmp.eq.s32.totalorder %s13, 5
      %p44 = por %p42, %p43
      %p45 = scmp.ne.s32.totalorder %s37, %s40
      %p46 = scmp.eq.s32.totalorder %s13, 0
      %p47 = por %p45, %p46
      %p48 = scmp.ne.s32.totalorder %s37, %s40
      %p49 = scmp.eq.s32.totalorder %s18, 5
      %p50 = por %p48, %p49
      %p51 = scmp.ne.s32.totalorder %s40, %s41
      %p52 = scmp.eq.s32.totalorder %s18, 0
      %p53 = por %p51, %p52
      %p54 = scmp.ne.s32.totalorder %s40, %s41
      %p55 = scmp.eq.s32.totalorder %s19, 5
      %p56 = por %p54, %p55
      %p58 = scmp.ne.s32.totalorder %s41, %s57
      %p59 = scmp.eq.s32.totalorder %s19, 0
      %p60 = por %p58, %p59
      %s61 = ssub.s32 %s20, %s32
      %s62 = ssub.s32 %s21, %s28
      %s63 = sor.u32 %s61, %s62
      %p64 = scmp.eq.s32.totalorder %s63, 0
      %s66 = sadd.s32 %s65, 1
      %s67 = scalar_select %p64, %s65, %s66
      %p70 = pneg %p64
      %p71 = scmp.eq.s32.totalorder %s13, 5
      %p72 = por %p70, %p71
      %p73 = scmp.ne.s32.totalorder %s65, %s68
      %p74 = scmp.eq.s32.totalorder %s13, 0
      %p75 = por %p73, %p74
      %p76 = scmp.ne.s32.totalorder %s65, %s68
      %p77 = scmp.eq.s32.totalorder %s18, 5
      %p78 = por %p76, %p77
      %p79 = scmp.ne.s32.totalorder %s68, %s69
      %p80 = scmp.eq.s32.totalorder %s18, 0
      %p81 = por %p79, %p80
      %p82 = scmp.ne.s32.totalorder %s68, %s69
      %p83 = scmp.eq.s32.totalorder %s19, 5
      %p84 = por %p82, %p83
      %p86 = scmp.ne.s32.totalorder %s69, %s85
      %p87 = scmp.eq.s32.totalorder %s19, 0
      %p88 = por %p86, %p87
      %p89 = scmp.le.s32.totalorder 1, %s13
      %p90 = scmp.lt.s32.totalorder %s13, 7
      %p91 = pnand %p89, %p90
      %p92 = pneg %p91
      // Predicated region
      $region9: #{tpu_custom_call.1} parent=5 // pred_check
        _
      $region10: #{tpu_custom_call.1} parent=5 // pred_check_branch
        %94 = sbr.rel (%p91) target = $region12
      $region11: #{tpu_custom_call.1} parent=5 // pred_region
        %s95 = ssub.s32 %s13, 1
      $region12: #{tpu_custom_call.1} parent=5 // pred_fallthru
        _
      %p96 = scmp.lt.s32.totalorder %s13, 6
      // Predicated region
      $region13: #{tpu_custom_call.1} parent=5 // pred_check
        %p97 = pneg %p96
      $region14: #{tpu_custom_call.1} parent=5 // pred_check_branch
        %99 = sbr.rel (%p97) target = $region16
      $region15: #{tpu_custom_call.1} parent=5 // pred_region
        // Predicated region
        $region17: #{tpu_custom_call.1} parent=15 // pred_check
          %p100 = pneg %p47
        $region18: #{tpu_custom_call.1} parent=15 // pred_check_branch
          %102 = sbr.rel (%p100) target = $region20
        $region19: #{tpu_custom_call.1} parent=15 // pred_region
          %s103 = sand.u32 %s37, 1
          %s104 = scalar_lea.sflag [#allocation3], %s103
          %s105 = sand.u32 %s37, 1
          %s106 = smul.addr %s105, 64
          %s107 = scalar_lea.vmem [#allocation2], %s106
          %109 = vsyncadd %s104, 0
          %s110 = smul.addr %s21, 8
          %s111 = smul.addr %s20, 24
          %s112 = sadd.s32 %s110, %s111
          %s113 = smul.addr %s112, 8
          %s114 = scalar_lea.hbm %s0, %s113
          %s115 = sshll.u32 %s114, 4
          %s116 = int_to_ptr.hbm [resolvable:$true] %s115
          %s117 = sshll.u32 %s107, 4
          %s118 = int_to_ptr.vmem [resolvable:$true] %s117
          %123 = dma.hbm_to_vmem [thread:$0]  %s116, 1024, %s118, %s104, 128, 128, 8
        $region20: #{tpu_custom_call.1} parent=15 // pred_fallthru
          _
      $region16: #{tpu_custom_call.1} parent=5 // pred_fallthru
        _
      %p124 = scmp.le.s32.totalorder 1, %s13
      %p125 = scmp.lt.s32.totalorder %s13, 7
      %p126 = pnand %p124, %p125
      %p127 = pneg %p126
      // Predicated region
      $region21: #{tpu_custom_call.1} parent=5 // pred_check
        _
      $region22: #{tpu_custom_call.1} parent=5 // pred_check_branch
        %129 = sbr.rel (%p126) target = $region24
      $region23: #{tpu_custom_call.1} parent=5 // pred_region
        %s130 = ssub.s32 %s13, 1
        %s131 = sand.u32 %s40, 1
        %s132 = scalar_lea.sflag [#allocation3], %s131
        %s133 = sand.u32 %s40, 1
        %s134 = smul.addr %s133, 64
        %s135 = scalar_lea.vmem [#allocation2], %s134
        // Predicated region
        $region25: #{tpu_custom_call.1} parent=23 // pred_check
          %p136 = pneg %p53
        $region26: #{tpu_custom_call.1} parent=23 // pred_check_branch
          %138 = sbr.rel (%p136) target = $region28
        $region27: #{tpu_custom_call.1} parent=23 // pred_region
          %140 = dma.done %s132, 1024
        $region28: #{tpu_custom_call.1} parent=23 // pred_fallthru
          _
        %s141 = sand.u32 %s40, 1
        %s142 = scalar_lea.sflag [#allocation3], %s141
        %s143 = sand.u32 %s40, 1
        %s144 = smul.addr %s143, 64
        %s145 = scalar_lea.vmem [#allocation2], %s144
        %p146 = pneg %p53
        %p147 = pneg %p50
        %p148 = pneg %p81
        %p149 = pneg %p78
        %s150 = sand.u32 %s68, 1
        %s151 = scalar_lea.sflag [#allocation4], %s150
        %s152 = sand.u32 %s68, 1
        %s153 = smul.addr %s152, 64
        %s154 = scalar_lea.vmem [#allocation5], %s153
        %v155 = vld [vmem:[%s135] sm:$0xff]
        %v156 = vld [vmem:[%s135 + $0x8] sm:$0xff]
        %v157 = vld [vmem:[%s135 + $0x10] sm:$0xff]
        %v158 = vld [vmem:[%s135 + $0x18] sm:$0xff]
        %v159 = vld [vmem:[%s135 + $0x20] sm:$0xff]
        %v160 = vld [vmem:[%s135 + $0x28] sm:$0xff]
        %v161 = vld [vmem:[%s135 + $0x30] sm:$0xff]
        %v162 = vld [vmem:[%s135 + $0x38] sm:$0xff]
        %vm163 = vcmask 523264
        %v164 = vsel %vm163, %v155, 0.0
        %v165 = vsel %vm163, %v156, 0.0
        %v166 = vadd.f32 %v164, %v165
        %v167 = vsel %vm163, %v157, 0.0
        %v168 = vadd.f32 %v166, %v167
        %v169 = vsel %vm163, %v158, 0.0
        %v170 = vadd.f32 %v168, %v169
        %v171 = vsel %vm163, %v159, 0.0
        %v172 = vadd.f32 %v170, %v171
        %v173 = vsel %vm163, %v160, 0.0
        %v174 = vadd.f32 %v172, %v173
        %v175 = vsel %vm163, %v161, 0.0
        %v176 = vadd.f32 %v174, %v175
        %v177 = vsel %vm163, %v162, 0.0
        %v178 = vadd.f32 %v176, %v177
        %179 = vadd.xlane.f32.xlu0 %v178
        %v180 = vpop.xlane.xlu0 %179
        %v181 = vrot.slane %v180, 4
        %v182 = vadd.f32 %v180, %v181
        %v183 = vrot.slane %v182, 2
        %v184 = vadd.f32 %v182, %v183
        %v185 = vrot.slane %v184, 1
        %v186 = vadd.f32 %v184, %v185
        %s187 = vtos %v186
        %v188 = vrcp.pop 4096.0
        %v189 = vmul.f32 4096.0, %v188
        %v190 = vsub.f32 1.0, %v189
        %v191 = vmul.f32 %v188, %v190
        %v192 = vadd.f32 %v188, %v191
        %vm193 = vweird.f32 %v188
        %v194 = vsel %vm193, %v188, %v192
        %s195 = vtos %v194
        %s196 = smul.f32 %s187, %s195
        %v197 = vstv %s196
        %v198 = vsub.f32 %v155, %v197
        %v199 = vsub.f32 %v156, %v197
        %v200 = vsub.f32 %v157, %v197
        %v201 = vsub.f32 %v158, %v197
        %v202 = vsub.f32 %v159, %v197
        %v203 = vsub.f32 %v160, %v197
        %v204 = vsub.f32 %v161, %v197
        %v205 = vsub.f32 %v162, %v197
        %206 = vst.msk [vmem:[%s154] sm:$0xff] %vm163, %v198
        %207 = vst.msk [vmem:[%s154 + $0x8] sm:$0xff] %vm163, %v199
        %208 = vst.msk [vmem:[%s154 + $0x10] sm:$0xff] %vm163, %v200
        %209 = vst.msk [vmem:[%s154 + $0x18] sm:$0xff] %vm163, %v201
        %210 = vst.msk [vmem:[%s154 + $0x20] sm:$0xff] %vm163, %v202
        %211 = vst.msk [vmem:[%s154 + $0x28] sm:$0xff] %vm163, %v203
        %212 = vst.msk [vmem:[%s154 + $0x30] sm:$0xff] %vm163, %v204
        %213 = vst.msk [vmem:[%s154 + $0x38] sm:$0xff] %vm163, %v205
        %s214 = sand.u32 %s68, 1
        %s215 = scalar_lea.sflag [#allocation4], %s214
        %s216 = sand.u32 %s68, 1
        %s217 = smul.addr %s216, 64
        %s218 = scalar_lea.vmem [#allocation5], %s217
        // Predicated region
        $region29: #{tpu_custom_call.1} parent=23 // pred_check
          %p219 = pneg %p78
        $region30: #{tpu_custom_call.1} parent=23 // pred_check_branch
          %221 = sbr.rel (%p219) target = $region32
        $region31: #{tpu_custom_call.1} parent=23 // pred_region
          %223 = vsyncadd %s215, 0
          %s224 = smul.addr %s23, 8
          %s225 = smul.addr %s22, 24
          %s226 = sadd.s32 %s224, %s225
          %s227 = smul.addr %s226, 8
          %s228 = scalar_lea.hbm %s1, %s227
          %s229 = sshll.u32 %s218, 4
          %s230 = int_to_ptr.vmem [resolvable:$true] %s229
          %s231 = sshll.u32 %s228, 4
          %s232 = int_to_ptr.hbm [resolvable:$true] %s231
          %237 = dma.vmem_to_hbm [thread:$0]  %s230, 1024, %s232, %s215, 128, 128, 8
        $region32: #{tpu_custom_call.1} parent=23 // pred_fallthru
          _
      $region24: #{tpu_custom_call.1} parent=5 // pred_fallthru
        _
      %p238 = scmp.le.s32.totalorder 2, %s13
      // Predicated region
      $region33: #{tpu_custom_call.1} parent=5 // pred_check
        %p239 = pneg %p238
      $region34: #{tpu_custom_call.1} parent=5 // pred_check_branch
        %241 = sbr.rel (%p239) target = $region36
      $region35: #{tpu_custom_call.1} parent=5 // pred_region
        %s242 = ssub.s32 %s13, 2
        // Predicated region
        $region37: #{tpu_custom_call.1} parent=35 // pred_check
          %p243 = pneg %p84
        $region38: #{tpu_custom_call.1} parent=35 // pred_check_branch
          %245 = sbr.rel (%p243) target = $region40
        $region39: #{tpu_custom_call.1} parent=35 // pred_region
          %s246 = sand.u32 %s69, 1
          %s247 = scalar_lea.sflag [#allocation4], %s246
          %s248 = sand.u32 %s69, 1
          %s249 = smul.addr %s248, 64
          %s250 = scalar_lea.vmem [#allocation5], %s249
          %252 = dma.done %s247, 1024
        $region40: #{tpu_custom_call.1} parent=35 // pred_fallthru
          _
      $region36: #{tpu_custom_call.1} parent=5 // pred_fallthru
        _
    $region6: #{tpu_custom_call.1} parent=1 // loop_footer
      %s17 = sadd.s32 1, %s13
    $region7: #{tpu_custom_call.1} parent=1 // loop_footer_branch
      %12 = sbr.rel target = $region3
    $region8: #{tpu_custom_call.1} parent=1 // loop_exit
      _
    %253 = vsyncpa [#allocation3], 1
    %s254 = scalar_lea.sflag [#allocation3], 1
    %255 = vsyncpa %s254, 1
    %256 = vsyncpa [#allocation4], 1
    %s257 = scalar_lea.sflag [#allocation4], 1
    %258 = vsyncpa %s257, 1

</llo_original>
